<compile_context>
chip_gen: v7x
topology: tpu7x:2x2x1
jax: 0.10.0
libtpu: 0.0.40
codegen_flags: <defaults>
</compile_context>

<pallas_src>
import jax
import jax.numpy as jnp
from jax.experimental import pallas as pl
from jax.experimental.pallas import tpu as pltpu


def _round_up(x, m):
    return (x + m - 1) // m * m


# ----------------------------------------------------------------------------
# Fused bidirectional LSTM recurrence kernel.
# grid = (T,), sequential ("arbitrary"). Both directions advance one step per
# grid iteration; the backward direction reads/writes time index T-1-t through
# its own index_maps. State (h, c) lives in resident, constant-index output
# blocks (accumulator pattern) and is initialized under pl.when(t == 0).
# ----------------------------------------------------------------------------
def _bilstm_kernel(len_ref, gxf_ref, gxb_ref, whhf_ref, whhb_ref,
                   outf_ref, outb_ref, h_ref, c_ref):
    t = pl.program_id(0)
    T = pl.num_programs(0)

    @pl.when(t == 0)
    def _init():
        h_ref[...] = jnp.zeros_like(h_ref)
        c_ref[...] = jnp.zeros_like(c_ref)

    lengths = len_ref[...]                     # (B, 1) int32, resident in VMEM
    H = whhf_ref.shape[0]

    def one_direction(gx, whh, h, c, valid):
        # gates = (x_t @ W_ih + b)  [precomputed, hoisted]  +  h @ W_hh
        gates = gx + jnp.dot(h.astype(whh.dtype), whh,
                             preferred_element_type=jnp.float32)
        i_g = jax.nn.sigmoid(gates[:, 0 * H:1 * H])
        f_g = jax.nn.sigmoid(gates[:, 1 * H:2 * H])
        g_g = jnp.tanh(gates[:, 2 * H:3 * H])
        o_g = jax.nn.sigmoid(gates[:, 3 * H:4 * H])
        c_new = f_g * c + i_g * g_g
        h_new = o_g * jnp.tanh(c_new)
        # packed-sequence semantics: freeze state / zero output on padded steps
        h_out = jnp.where(valid, h_new, h)
        c_out = jnp.where(valid, c_new, c)
        y_out = jnp.where(valid, h_new, jnp.zeros_like(h_new))
        return h_out, c_out, y_out

    # forward direction consumes time index t
    h_f, c_f, y_f = one_direction(gxf_ref[0], whhf_ref[...],
                                  h_ref[0], c_ref[0], t < lengths)
    h_ref[0] = h_f
    c_ref[0] = c_f
    outf_ref[0] = y_f

    # backward direction consumes time index T-1-t (handled by its index_maps)
    h_b, c_b, y_b = one_direction(gxb_ref[0], whhb_ref[...],
                                  h_ref[1], c_ref[1], (T - 1 - t) < lengths)
    h_ref[1] = h_b
    c_ref[1] = c_b
    outb_ref[0] = y_b


def _bilstm_layer(gx_f, gx_b, whh_f, whh_b, lengths_col):
    """Fused bidirectional LSTM recurrence over the whole sequence.

    gx_f, gx_b : (T, B, 4H) f32  precomputed input projections (+bias),
                 both in natural time order (reversal is in the index_map).
    whh_f/b    : (H, 4H) bf16 recurrent weights.
    lengths_col: (B, 1) int32 sequence lengths.
    returns out_f (T,B,H), out_b (T,B,H), h_n (2,B,H), c_n (2,B,H)
    """
    T, B, G = gx_f.shape
    H = whh_f.shape[0]
    assert G == 4 * H

    grid_spec = pltpu.PrefetchScalarGridSpec(
        num_scalar_prefetch=0,
        grid=(T,),
        in_specs=[
            pl.BlockSpec((B, 1), lambda t: (0, 0)),                # lengths (resident)
            pl.BlockSpec((1, B, G), lambda t: (t, 0, 0)),          # gx fwd
            pl.BlockSpec((1, B, G), lambda t: (T - 1 - t, 0, 0)),  # gx bwd (reversed)
            pl.BlockSpec((H, G), lambda t: (0, 0)),                # W_hh fwd (resident)
            pl.BlockSpec((H, G), lambda t: (0, 0)),                # W_hh bwd (resident)
        ],
        out_specs=[
            pl.BlockSpec((1, B, H), lambda t: (t, 0, 0)),          # out fwd
            pl.BlockSpec((1, B, H), lambda t: (T - 1 - t, 0, 0)),  # out bwd (reversed)
            pl.BlockSpec((2, B, H), lambda t: (0, 0, 0)),          # final h (resident)
            pl.BlockSpec((2, B, H), lambda t: (0, 0, 0)),          # final c (resident)
        ],
    )
    out_shape = (
        jax.ShapeDtypeStruct((T, B, H), jnp.float32),
        jax.ShapeDtypeStruct((T, B, H), jnp.float32),
        jax.ShapeDtypeStruct((2, B, H), jnp.float32),
        jax.ShapeDtypeStruct((2, B, H), jnp.float32),
    )
    return pl.pallas_call(
        _bilstm_kernel,
        out_shape=out_shape,
        grid_spec=grid_spec,
        compiler_params=pltpu.CompilerParams(
            dimension_semantics=("arbitrary",)),   # serial recurrence over T
    )(lengths_col, gx_f, gx_b, whh_f, whh_b)


# ----------------------------------------------------------------------------
# Hoisted input projection: one big MXU matmul over all timesteps.
# ----------------------------------------------------------------------------
def _preproject(parts, weights, bias):
    """sum_i parts[i] @ weights[i] + bias, computed for all timesteps at once.

    parts[i]: (T, B, Di) f32; weights[i]: (Di, 4H) bf16; bias: (1, 4H) f32.
    Splitting the weight avoids materializing concat([out_f, out_b], -1).
    """
    T, B = parts[0].shape[:2]
    acc = jnp.broadcast_to(bias, (T * B, bias.shape[-1])).astype(jnp.float32)
    for x, w in zip(parts, weights):
        acc = acc + jnp.dot(x.reshape(T * B, -1).astype(jnp.bfloat16), w,
                            preferred_element_type=jnp.float32)
    return acc.reshape(T, B, -1)


# ----------------------------------------------------------------------------
# Parameter init (deterministic, matches PyTorch shapes / init distributions)
# ----------------------------------------------------------------------------
def init_encoder_params(key, vocab_size, embedding_dim, hidden_dim, num_layers=2):
    keys = jax.random.split(key, 1 + num_layers * 2 * 4)
    k_iter = iter(keys)

    emb = jax.random.normal(next(k_iter), (vocab_size, embedding_dim), jnp.float32)
    emb = emb.at[0].set(0.0)   # padding_idx=0 row is zero

    bound = 1.0 / float(hidden_dim) ** 0.5

    def u(k, shape):
        return jax.random.uniform(k, shape, jnp.float32, -bound, bound)

    layers = []
    for layer in range(num_layers):
        din = embedding_dim if layer == 0 else 2 * hidden_dim
        dirs = {}
        for d in ("fwd", "bwd"):
            # PyTorch stores W_ih (4H, din), W_hh (4H, H); we pre-transpose and
            # keep the matmul operands in bf16 (f32 accumulation in the kernels).
            w_ih = u(next(k_iter), (4 * hidden_dim, din)).T
            w_hh = u(next(k_iter), (4 * hidden_dim, hidden_dim)).T
            b_ih = u(next(k_iter), (4 * hidden_dim,))
            b_hh = u(next(k_iter), (4 * hidden_dim,))
            dirs[d] = {
                "w_ih": w_ih.astype(jnp.bfloat16),
                "w_hh": w_hh.astype(jnp.bfloat16),
                "b": (b_ih + b_hh).reshape(1, 4 * hidden_dim),   # folded into gx
            }
        layers.append(dirs)

    return {"embedding": emb, "lstm": layers}


# ----------------------------------------------------------------------------
# Encoder forward. Fully jittable: returns full-T output; truncation to
# max(lengths) (pad_packed_sequence behaviour) is done on the host outside jit.
# ----------------------------------------------------------------------------
@jax.jit
def encoder_forward(params, tokens, lengths):
    emb = params["embedding"][tokens]               # (B, T, E) embedding gather
    B, T, _ = emb.shape
    H = params["lstm"][0]["fwd"]["w_hh"].shape[0]
    L = len(params["lstm"])

    # Pad batch to a multiple of 8 so the sublane dimension of every vreg is
    # full inside the kernel. Padded rows get length 0 -> stay zero throughout.
    Bp = _round_up(max(B, 1), 8)
    pad = Bp - B
    emb = jnp.pad(emb, ((0, pad), (0, 0), (0, 0)))
    lengths_p = jnp.pad(lengths.astype(jnp.int32), (0, pad))
    lengths_col = lengths_p[:, None]                # (Bp, 1)

    parts = [jnp.transpose(emb, (1, 0, 2))]         # (T, Bp, E) time-major

    hiddens, cells = [], []
    for layer in range(L):
        wf = params["lstm"][layer]["fwd"]
        wb = params["lstm"][layer]["bwd"]
        if layer == 0:
            wf_parts = [wf["w_ih"]]
            wb_parts = [wb["w_ih"]]
        else:
            # layer input is [out_f | out_b]; split W_ih so no concat is needed
            wf_parts = [wf["w_ih"][:H], wf["w_ih"][H:]]
            wb_parts = [wb["w_ih"][:H], wb["w_ih"][H:]]

        # Hoisted input projection for ALL timesteps (one big matmul per dir).
        gx_f = _preproject(parts, wf_parts, wf["b"])
        gx_b = _preproject(parts, wb_parts, wb["b"])

        out_f, out_b, h_n, c_n = _bilstm_layer(
            gx_f, gx_b, wf["w_hh"], wb["w_hh"], lengths_col)

        parts = [out_f, out_b]
        hiddens.append(jnp.concatenate([h_n[0], h_n[1]], axis=-1))   # (Bp, 2H)
        cells.append(jnp.concatenate([c_n[0], c_n[1]], axis=-1))

    output = jnp.concatenate(parts, axis=-1)        # (T, Bp, 2H)
    output = jnp.transpose(output, (1, 0, 2))[:B]   # (B, T, 2H) batch-first
    hidden = jnp.stack(hiddens, axis=0)[:, :B]      # (L, B, 2H)
    cell = jnp.stack(cells, axis=0)[:, :B]          # (L, B, 2H)
    return output, (hidden, cell)


def encoder_apply(params, tokens, lengths):
    """Matches the PyTorch module: output truncated to max(lengths)."""
    output, (hidden, cell) = encoder_forward(params, tokens, lengths)
    t_out = int(jax.device_get(lengths).max())      # host-side, outside jit
    return output[:, :t_out, :], (hidden, cell)


if __name__ == "__main__":
    vocab_size, embedding_dim, hidden_dim, num_layers = 50, 32, 32, 2
    B, T = 2, 8

    key = jax.random.PRNGKey(0)
    k_param, k_tok = jax.random.split(key)

    params = init_encoder_params(k_param, vocab_size, embedding_dim,
                                 hidden_dim, num_layers)

    lengths = jnp.array([8, 5], dtype=jnp.int32)
    tokens = jax.random.randint(k_tok, (B, T), 1, vocab_size, dtype=jnp.int32)
    # zero-pad past each sequence length (padding_idx = 0)
    tokens = jnp.where(jnp.arange(T)[None, :] < lengths[:, None], tokens, 0)

    output, (hidden, cell) = encoder_apply(params, tokens, lengths)
    jax.block_until_ready((output, hidden, cell))

    t_out = int(jax.device_get(lengths).max())
    assert output.shape == (B, t_out, 2 * hidden_dim)
    assert hidden.shape == (num_layers, B, 2 * hidden_dim)
    assert cell.shape == (num_layers, B, 2 * hidden_dim)
    print("KERNEL_OK")
</pallas_src>

<mosaic_0001>
module attributes {stable_mosaic.version = 11 : i64} {
  func.func @_bilstm_kernel(%arg0: i32, %arg1: memref<8x1xi32, #tpu.memory_space<vmem>>, %arg2: memref<1x8x128xf32, #tpu.memory_space<vmem>>, %arg3: memref<1x8x128xf32, #tpu.memory_space<vmem>>, %arg4: memref<32x128xbf16, #tpu.memory_space<vmem>>, %arg5: memref<32x128xbf16, #tpu.memory_space<vmem>>, %arg6: memref<1x8x32xf32, #tpu.memory_space<vmem>>, %arg7: memref<1x8x32xf32, #tpu.memory_space<vmem>>, %arg8: memref<2x8x32xf32, #tpu.memory_space<vmem>>, %arg9: memref<2x8x32xf32, #tpu.memory_space<vmem>>) attributes {dimension_semantics = [#tpu.dimension_semantics<arbitrary>], iteration_bounds = array<i64: 8>, scalar_prefetch = 0 : i64, scratch_operands = 0 : i64, tpu.core_type = #tpu.core_type<tc>, window_params = [{pipeline_mode = #tpu.pipeline_mode<synchronous>, transform_indices = @transform_0, window_bounds = array<i64: 8, 1>}, {transform_indices = @transform_1, window_bounds = array<i64: 1, 8, 128>}, {transform_indices = @transform_2, window_bounds = array<i64: 1, 8, 128>}, {pipeline_mode = #tpu.pipeline_mode<synchronous>, transform_indices = @transform_3, window_bounds = array<i64: 32, 128>}, {pipeline_mode = #tpu.pipeline_mode<synchronous>, transform_indices = @transform_4, window_bounds = array<i64: 32, 128>}, {transform_indices = @transform_5, window_bounds = array<i64: 1, 8, 32>}, {transform_indices = @transform_6, window_bounds = array<i64: 1, 8, 32>}, {pipeline_mode = #tpu.pipeline_mode<synchronous>, transform_indices = @transform_7, window_bounds = array<i64: 2, 8, 32>}, {pipeline_mode = #tpu.pipeline_mode<synchronous>, transform_indices = @transform_8, window_bounds = array<i64: 2, 8, 32>}]} {
    %c0_i32 = arith.constant 0 : i32
    %0 = arith.cmpi eq, %arg0, %c0_i32 : i32
    %1 = arith.extui %0 : i1 to i32
    %c0_i32_0 = arith.constant 0 : i32
    %2 = arith.cmpi ne, %1, %c0_i32_0 : i32
    scf.if %2 {
      %cst_50 = arith.constant 0.000000e+00 : f32
      %117 = vector.broadcast %cst_50 : f32 to vector<2x8x32xf32>
      %c0_51 = arith.constant 0 : index
      %c0_52 = arith.constant 0 : index
      %c0_53 = arith.constant 0 : index
      %118 = vector.load %arg8[%c0_51, %c0_52, %c0_53] : memref<2x8x32xf32, #tpu.memory_space<vmem>>, vector<2x8x32xf32>
      tpu.vector_store %arg8[%c0_51, %c0_52, %c0_53], %117 {strides = array<i32>} : memref<2x8x32xf32, #tpu.memory_space<vmem>>, vector<2x8x32xf32>,
      %cst_54 = arith.constant 0.000000e+00 : f32
      %119 = vector.broadcast %cst_54 : f32 to vector<2x8x32xf32>
      %c0_55 = arith.constant 0 : index
      %c0_56 = arith.constant 0 : index
      %c0_57 = arith.constant 0 : index
      %120 = vector.load %arg9[%c0_55, %c0_56, %c0_57] : memref<2x8x32xf32, #tpu.memory_space<vmem>>, vector<2x8x32xf32>
      tpu.vector_store %arg9[%c0_55, %c0_56, %c0_57], %119 {strides = array<i32>} : memref<2x8x32xf32, #tpu.memory_space<vmem>>, vector<2x8x32xf32>,
    } else {
    }
    %c0 = arith.constant 0 : index
    %c0_1 = arith.constant 0 : index
    %3 = vector.load %arg1[%c0, %c0_1] : memref<8x1xi32, #tpu.memory_space<vmem>>, vector<8x1xi32>
    %c0_2 = arith.constant 0 : index
    %c0_3 = arith.constant 0 : index
    %c0_4 = arith.constant 0 : index
    %4 = vector.load %arg2[%c0_2, %c0_3, %c0_4] : memref<1x8x128xf32, #tpu.memory_space<vmem>>, vector<1x8x128xf32>
    %5 = vector.shape_cast %4 : vector<1x8x128xf32> to vector<8x128xf32>
    %c0_5 = arith.constant 0 : index
    %c0_6 = arith.constant 0 : index
    %6 = vector.load %arg4[%c0_5, %c0_6] : memref<32x128xbf16, #tpu.memory_space<vmem>>, vector<32x128xbf16>
    %c0_7 = arith.constant 0 : index
    %c0_8 = arith.constant 0 : index
    %c0_9 = arith.constant 0 : index
    %7 = vector.load %arg8[%c0_7, %c0_8, %c0_9] : memref<2x8x32xf32, #tpu.memory_space<vmem>>, vector<1x8x32xf32>
    %8 = vector.shape_cast %7 : vector<1x8x32xf32> to vector<8x32xf32>
    %c0_10 = arith.constant 0 : index
    %c0_11 = arith.constant 0 : index
    %c0_12 = arith.constant 0 : index
    %9 = vector.load %arg9[%c0_10, %c0_11, %c0_12] : memref<2x8x32xf32, #tpu.memory_space<vmem>>, vector<1x8x32xf32>
    %10 = vector.shape_cast %9 : vector<1x8x32xf32> to vector<8x32xf32>
    %11 = vector.broadcast %arg0 : i32 to vector<8x1xi32>
    %12 = arith.cmpi slt, %11, %3 : vector<8x1xi32>
    %13 = arith.truncf %8 : vector<8x32xf32> to vector<8x32xbf16>
    %cst = arith.constant dense<0.000000e+00> : vector<8x128xf32>
    %14 = tpu.matmul %13, %6, %cst {dimension_numbers = #tpu.dot_dimension_numbers<[1], [0], [0], [1], [0, 0, 1, 1], [], []>} : vector<8x32xbf16>, vector<32x128xbf16>, vector<8x128xf32> -> vector<8x128xf32>
    %15 = arith.addf %5, %14 : vector<8x128xf32>
    %16 = vector.extract_strided_slice %15 {offsets = [0, 0], sizes = [8, 32], strides = [1, 1]} : vector<8x128xf32> to vector<8x32xf32>
    %17 = arith.negf %16 : vector<8x32xf32>
    %18 = math.exp %17 : vector<8x32xf32>
    %cst_13 = arith.constant 1.000000e+00 : f32
    %19 = vector.broadcast %cst_13 : f32 to vector<8x32xf32>
    %20 = arith.addf %19, %18 : vector<8x32xf32>
    %21 = arith.divf %19, %20 : vector<8x32xf32>
    %22 = vector.extract_strided_slice %15 {offsets = [0, 32], sizes = [8, 32], strides = [1, 1]} : vector<8x128xf32> to vector<8x32xf32>
    %23 = arith.negf %22 : vector<8x32xf32>
    %24 = math.exp %23 : vector<8x32xf32>
    %cst_14 = arith.constant 1.000000e+00 : f32
    %25 = vector.broadcast %cst_14 : f32 to vector<8x32xf32>
    %26 = arith.addf %25, %24 : vector<8x32xf32>
    %27 = arith.divf %25, %26 : vector<8x32xf32>
    %28 = vector.extract_strided_slice %15 {offsets = [0, 64], sizes = [8, 32], strides = [1, 1]} : vector<8x128xf32> to vector<8x32xf32>
    %29 = math.tanh %28 : vector<8x32xf32>
    %30 = vector.extract_strided_slice %15 {offsets = [0, 96], sizes = [8, 32], strides = [1, 1]} : vector<8x128xf32> to vector<8x32xf32>
    %31 = arith.negf %30 : vector<8x32xf32>
    %32 = math.exp %31 : vector<8x32xf32>
    %cst_15 = arith.constant 1.000000e+00 : f32
    %33 = vector.broadcast %cst_15 : f32 to vector<8x32xf32>
    %34 = arith.addf %33, %32 : vector<8x32xf32>
    %35 = arith.divf %33, %34 : vector<8x32xf32>
    %36 = arith.mulf %27, %10 : vector<8x32xf32>
    %37 = arith.mulf %21, %29 : vector<8x32xf32>
    %38 = arith.addf %36, %37 : vector<8x32xf32>
    %39 = math.tanh %38 : vector<8x32xf32>
    %40 = arith.mulf %35, %39 : vector<8x32xf32>
    %41 = vector.shape_cast %12 : vector<8x1xi1> to vector<8x1xi1>
    %42 = vector.broadcast %41 : vector<8x1xi1> to vector<8x32xi1>
    %43 = arith.select %42, %40, %8 : vector<8x32xi1>, vector<8x32xf32>
    %44 = vector.shape_cast %12 : vector<8x1xi1> to vector<8x1xi1>
    %45 = vector.broadcast %44 : vector<8x1xi1> to vector<8x32xi1>
    %46 = arith.select %45, %38, %10 : vector<8x32xi1>, vector<8x32xf32>
    %cst_16 = arith.constant 0.000000e+00 : f32
    %47 = vector.broadcast %cst_16 : f32 to vector<8x32xf32>
    %48 = vector.shape_cast %12 : vector<8x1xi1> to vector<8x1xi1>
    %49 = vector.broadcast %48 : vector<8x1xi1> to vector<8x32xi1>
    %50 = arith.select %49, %40, %47 : vector<8x32xi1>, vector<8x32xf32>
    %c0_17 = arith.constant 0 : index
    %c0_18 = arith.constant 0 : index
    %c0_19 = arith.constant 0 : index
    %51 = vector.load %arg8[%c0_17, %c0_18, %c0_19] : memref<2x8x32xf32, #tpu.memory_space<vmem>>, vector<1x8x32xf32>
    %52 = vector.shape_cast %51 : vector<1x8x32xf32> to vector<8x32xf32>
    %53 = vector.shape_cast %43 : vector<8x32xf32> to vector<1x8x32xf32>
    tpu.vector_store %arg8[%c0_17, %c0_18, %c0_19], %53 {strides = array<i32>} : memref<2x8x32xf32, #tpu.memory_space<vmem>>, vector<1x8x32xf32>,
    %c0_20 = arith.constant 0 : index
    %c0_21 = arith.constant 0 : index
    %c0_22 = arith.constant 0 : index
    %54 = vector.load %arg9[%c0_20, %c0_21, %c0_22] : memref<2x8x32xf32, #tpu.memory_space<vmem>>, vector<1x8x32xf32>
    %55 = vector.shape_cast %54 : vector<1x8x32xf32> to vector<8x32xf32>
    %56 = vector.shape_cast %46 : vector<8x32xf32> to vector<1x8x32xf32>
    tpu.vector_store %arg9[%c0_20, %c0_21, %c0_22], %56 {strides = array<i32>} : memref<2x8x32xf32, #tpu.memory_space<vmem>>, vector<1x8x32xf32>,
    %c0_23 = arith.constant 0 : index
    %c0_24 = arith.constant 0 : index
    %c0_25 = arith.constant 0 : index
    %57 = vector.load %arg6[%c0_23, %c0_24, %c0_25] : memref<1x8x32xf32, #tpu.memory_space<vmem>>, vector<1x8x32xf32>
    %58 = vector.shape_cast %57 : vector<1x8x32xf32> to vector<8x32xf32>
    %59 = vector.shape_cast %50 : vector<8x32xf32> to vector<1x8x32xf32>
    tpu.vector_store %arg6[%c0_23, %c0_24, %c0_25], %59 {strides = array<i32>} : memref<1x8x32xf32, #tpu.memory_space<vmem>>, vector<1x8x32xf32>,
    %c0_26 = arith.constant 0 : index
    %c0_27 = arith.constant 0 : index
    %c0_28 = arith.constant 0 : index
    %60 = vector.load %arg3[%c0_26, %c0_27, %c0_28] : memref<1x8x128xf32, #tpu.memory_space<vmem>>, vector<1x8x128xf32>
    %61 = vector.shape_cast %60 : vector<1x8x128xf32> to vector<8x128xf32>
    %c0_29 = arith.constant 0 : index
    %c0_30 = arith.constant 0 : index
    %62 = vector.load %arg5[%c0_29, %c0_30] : memref<32x128xbf16, #tpu.memory_space<vmem>>, vector<32x128xbf16>
    %c1 = arith.constant 1 : index
    %c0_31 = arith.constant 0 : index
    %c0_32 = arith.constant 0 : index
    %63 = vector.load %arg8[%c1, %c0_31, %c0_32] : memref<2x8x32xf32, #tpu.memory_space<vmem>>, vector<1x8x32xf32>
    %64 = vector.shape_cast %63 : vector<1x8x32xf32> to vector<8x32xf32>
    %c1_33 = arith.constant 1 : index
    %c0_34 = arith.constant 0 : index
    %c0_35 = arith.constant 0 : index
    %65 = vector.load %arg9[%c1_33, %c0_34, %c0_35] : memref<2x8x32xf32, #tpu.memory_space<vmem>>, vector<1x8x32xf32>
    %66 = vector.shape_cast %65 : vector<1x8x32xf32> to vector<8x32xf32>
    %c7_i32 = arith.constant 7 : i32
    %67 = arith.subi %c7_i32, %arg0 : i32
    %68 = vector.broadcast %67 : i32 to vector<8x1xi32>
    %69 = arith.cmpi slt, %68, %3 : vector<8x1xi32>
    %70 = arith.truncf %64 : vector<8x32xf32> to vector<8x32xbf16>
    %cst_36 = arith.constant dense<0.000000e+00> : vector<8x128xf32>
    %71 = tpu.matmul %70, %62, %cst_36 {dimension_numbers = #tpu.dot_dimension_numbers<[1], [0], [0], [1], [0, 0, 1, 1], [], []>} : vector<8x32xbf16>, vector<32x128xbf16>, vector<8x128xf32> -> vector<8x128xf32>
    %72 = arith.addf %61, %71 : vector<8x128xf32>
    %73 = vector.extract_strided_slice %72 {offsets = [0, 0], sizes = [8, 32], strides = [1, 1]} : vector<8x128xf32> to vector<8x32xf32>
    %74 = arith.negf %73 : vector<8x32xf32>
    %75 = math.exp %74 : vector<8x32xf32>
    %cst_37 = arith.constant 1.000000e+00 : f32
    %76 = vector.broadcast %cst_37 : f32 to vector<8x32xf32>
    %77 = arith.addf %76, %75 : vector<8x32xf32>
    %78 = arith.divf %76, %77 : vector<8x32xf32>
    %79 = vector.extract_strided_slice %72 {offsets = [0, 32], sizes = [8, 32], strides = [1, 1]} : vector<8x128xf32> to vector<8x32xf32>
    %80 = arith.negf %79 : vector<8x32xf32>
    %81 = math.exp %80 : vector<8x32xf32>
    %cst_38 = arith.constant 1.000000e+00 : f32
    %82 = vector.broadcast %cst_38 : f32 to vector<8x32xf32>
    %83 = arith.addf %82, %81 : vector<8x32xf32>
    %84 = arith.divf %82, %83 : vector<8x32xf32>
    %85 = vector.extract_strided_slice %72 {offsets = [0, 64], sizes = [8, 32], strides = [1, 1]} : vector<8x128xf32> to vector<8x32xf32>
    %86 = math.tanh %85 : vector<8x32xf32>
    %87 = vector.extract_strided_slice %72 {offsets = [0, 96], sizes = [8, 32], strides = [1, 1]} : vector<8x128xf32> to vector<8x32xf32>
    %88 = arith.negf %87 : vector<8x32xf32>
    %89 = math.exp %88 : vector<8x32xf32>
    %cst_39 = arith.constant 1.000000e+00 : f32
    %90 = vector.broadcast %cst_39 : f32 to vector<8x32xf32>
    %91 = arith.addf %90, %89 : vector<8x32xf32>
    %92 = arith.divf %90, %91 : vector<8x32xf32>
    %93 = arith.mulf %84, %66 : vector<8x32xf32>
    %94 = arith.mulf %78, %86 : vector<8x32xf32>
    %95 = arith.addf %93, %94 : vector<8x32xf32>
    %96 = math.tanh %95 : vector<8x32xf32>
    %97 = arith.mulf %92, %96 : vector<8x32xf32>
    %98 = vector.shape_cast %69 : vector<8x1xi1> to vector<8x1xi1>
    %99 = vector.broadcast %98 : vector<8x1xi1> to vector<8x32xi1>
    %100 = arith.select %99, %97, %64 : vector<8x32xi1>, vector<8x32xf32>
    %101 = vector.shape_cast %69 : vector<8x1xi1> to vector<8x1xi1>
    %102 = vector.broadcast %101 : vector<8x1xi1> to vector<8x32xi1>
    %103 = arith.select %102, %95, %66 : vector<8x32xi1>, vector<8x32xf32>
    %cst_40 = arith.constant 0.000000e+00 : f32
    %104 = vector.broadcast %cst_40 : f32 to vector<8x32xf32>
    %105 = vector.shape_cast %69 : vector<8x1xi1> to vector<8x1xi1>
    %106 = vector.broadcast %105 : vector<8x1xi1> to vector<8x32xi1>
    %107 = arith.select %106, %97, %104 : vector<8x32xi1>, vector<8x32xf32>
    %c1_41 = arith.constant 1 : index
    %c0_42 = arith.constant 0 : index
    %c0_43 = arith.constant 0 : index
    %108 = vector.load %arg8[%c1_41, %c0_42, %c0_43] : memref<2x8x32xf32, #tpu.memory_space<vmem>>, vector<1x8x32xf32>
    %109 = vector.shape_cast %108 : vector<1x8x32xf32> to vector<8x32xf32>
    %110 = vector.shape_cast %100 : vector<8x32xf32> to vector<1x8x32xf32>
    tpu.vector_store %arg8[%c1_41, %c0_42, %c0_43], %110 {strides = array<i32>} : memref<2x8x32xf32, #tpu.memory_space<vmem>>, vector<1x8x32xf32>,
    %c1_44 = arith.constant 1 : index
    %c0_45 = arith.constant 0 : index
    %c0_46 = arith.constant 0 : index
    %111 = vector.load %arg9[%c1_44, %c0_45, %c0_46] : memref<2x8x32xf32, #tpu.memory_space<vmem>>, vector<1x8x32xf32>
    %112 = vector.shape_cast %111 : vector<1x8x32xf32> to vector<8x32xf32>
    %113 = vector.shape_cast %103 : vector<8x32xf32> to vector<1x8x32xf32>
    tpu.vector_store %arg9[%c1_44, %c0_45, %c0_46], %113 {strides = array<i32>} : memref<2x8x32xf32, #tpu.memory_space<vmem>>, vector<1x8x32xf32>,
    %c0_47 = arith.constant 0 : index
    %c0_48 = arith.constant 0 : index
    %c0_49 = arith.constant 0 : index
    %114 = vector.load %arg7[%c0_47, %c0_48, %c0_49] : memref<1x8x32xf32, #tpu.memory_space<vmem>>, vector<1x8x32xf32>
    %115 = vector.shape_cast %114 : vector<1x8x32xf32> to vector<8x32xf32>
    %116 = vector.shape_cast %107 : vector<8x32xf32> to vector<1x8x32xf32>
    tpu.vector_store %arg7[%c0_47, %c0_48, %c0_49], %116 {strides = array<i32>} : memref<1x8x32xf32, #tpu.memory_space<vmem>>, vector<1x8x32xf32>,
    return
  }
  func.func @transform_0(%arg0: i32) -> (i32, i32) {
    %c0_i32 = arith.constant 0 : i32
    %c0_i32_0 = arith.constant 0 : i32
    %c0_i32_1 = arith.constant 0 : i32
    return %c0_i32, %c0_i32_0 : i32, i32
  }
  func.func @transform_1(%arg0: i32) -> (i32, i32, i32) {
    %c0_i32 = arith.constant 0 : i32
    %c0_i32_0 = arith.constant 0 : i32
    %c0_i32_1 = arith.constant 0 : i32
    return %arg0, %c0_i32, %c0_i32_0 : i32, i32, i32
  }
  func.func @transform_2(%arg0: i32) -> (i32, i32, i32) {
    %c7_i32 = arith.constant 7 : i32
    %0 = arith.subi %c7_i32, %arg0 : i32
    %c0_i32 = arith.constant 0 : i32
    %c0_i32_0 = arith.constant 0 : i32
    %c0_i32_1 = arith.constant 0 : i32
    return %0, %c0_i32, %c0_i32_0 : i32, i32, i32
  }
  func.func @transform_3(%arg0: i32) -> (i32, i32) {
    %c0_i32 = arith.constant 0 : i32
    %c0_i32_0 = arith.constant 0 : i32
    %c0_i32_1 = arith.constant 0 : i32
    return %c0_i32, %c0_i32_0 : i32, i32
  }
  func.func @transform_4(%arg0: i32) -> (i32, i32) {
    %c0_i32 = arith.constant 0 : i32
    %c0_i32_0 = arith.constant 0 : i32
    %c0_i32_1 = arith.constant 0 : i32
    return %c0_i32, %c0_i32_0 : i32, i32
  }
  func.func @transform_5(%arg0: i32) -> (i32, i32, i32) {
    %c0_i32 = arith.constant 0 : i32
    %c0_i32_0 = arith.constant 0 : i32
    %c0_i32_1 = arith.constant 0 : i32
    return %arg0, %c0_i32, %c0_i32_0 : i32, i32, i32
  }
  func.func @transform_6(%arg0: i32) -> (i32, i32, i32) {
    %c7_i32 = arith.constant 7 : i32
    %0 = arith.subi %c7_i32, %arg0 : i32
    %c0_i32 = arith.constant 0 : i32
    %c0_i32_0 = arith.constant 0 : i32
    %c0_i32_1 = arith.constant 0 : i32
    return %0, %c0_i32, %c0_i32_0 : i32, i32, i32
  }
  func.func @transform_7(%arg0: i32) -> (i32, i32, i32) {
    %c0_i32 = arith.constant 0 : i32
    %c0_i32_0 = arith.constant 0 : i32
    %c0_i32_1 = arith.constant 0 : i32
    %c0_i32_2 = arith.constant 0 : i32
    return %c0_i32, %c0_i32_0, %c0_i32_1 : i32, i32, i32
  }
  func.func @transform_8(%arg0: i32) -> (i32, i32, i32) {
    %c0_i32 = arith.constant 0 : i32
    %c0_i32_0 = arith.constant 0 : i32
    %c0_i32_1 = arith.constant 0 : i32
    %c0_i32_2 = arith.constant 0 : i32
    return %c0_i32, %c0_i32_0, %c0_i32_1 : i32, i32, i32
  }
}

</mosaic_0001>

<llo_original>
// kernel: encoder_forward.2
$region0: #{encoder_forward.2}
  #allocation0 [shape = 'u32[]', space=smem, size = 0x4, offset = 0x4, fixed_abs, tag = 'smem constant byte address 0x4 - core index']
  #allocation1 [shape = 'u32[144,128]{1,0:T(1,128)}', space=vmem, size = 0x12000, scoped, tag = 'internal scratch']
  %s0 = inlined_call_operand.vmem [shape: s32[8,1], index: 0, kind: input, shape index: {}]
  %s1 = inlined_call_operand.vmem [shape: f32[8,8,128], index: 1, kind: input, shape index: {}]
  %s2 = inlined_call_operand.vmem [shape: f32[8,8,128], index: 2, kind: input, shape index: {}]
  %s3 = inlined_call_operand.vmem [shape: bf16[32,128], index: 3, kind: input, shape index: {}]
  %s4 = inlined_call_operand.vmem [shape: bf16[32,128], index: 4, kind: input, shape index: {}]
  %s5 = inlined_call_operand.vmem [shape: f32[8,8,32], index: 5, kind: output, shape index: {0}]
  %s6 = inlined_call_operand.vmem [shape: f32[8,8,32], index: 6, kind: output, shape index: {1}]
  %s7 = inlined_call_operand.vmem [shape: f32[2,8,32], index: 7, kind: output, shape index: {2}]
  %s8 = inlined_call_operand.vmem [shape: f32[2,8,32], index: 8, kind: output, shape index: {3}]
  %9 = xla_tuple %s5, %s6, %s7, %s8
  %s10 = sld [smem:[#allocation0]]
  $region81: #{encoder_forward.2} parent=0
    _
  %s12 = ssub.s32 1, %s10
  %s13 = scalar_select 0, %s12, %s10
  loop: start=0, step=1, limit=10
  $region2: #{encoder_forward.2} parent=0 // loop_pre_header
    _
  $region3: #{encoder_forward.2} parent=0 // loop_header
    %s15 = sphi 0, %s19
    %p16 = scmp.ge.s32.totalorder %s15, 10
    %s23 = sphi 0, %s23
    %s25 = sphi 0, %s23
    %s26 = sphi 0, %s25
    %s40 = sphi 0, %s26
    %s46 = sphi 0, %s48
    %s49 = sphi 0, %s46
    %s50 = sphi 0, %s49
    %s66 = sphi 0, %s50
    %s74 = sphi 0, %s76
    %s77 = sphi 0, %s74
    %s78 = sphi 0, %s77
    %s94 = sphi 0, %s78
    %s98 = sphi 0, %s98
    %s100 = sphi 0, %s98
    %s101 = sphi 0, %s100
    %s115 = sphi 0, %s101
    %s119 = sphi 0, %s119
    %s121 = sphi 0, %s119
    %s122 = sphi 0, %s121
    %s136 = sphi 0, %s122
    %s142 = sphi 0, %s144
    %s145 = sphi 0, %s142
    %s146 = sphi 0, %s145
    %s162 = sphi 0, %s146
    %s170 = sphi 0, %s172
    %s173 = sphi 0, %s170
    %s174 = sphi 0, %s173
    %s190 = sphi 0, %s174
    %s194 = sphi 0, %s194
    %s196 = sphi 0, %s194
    %s197 = sphi 0, %s196
    %s211 = sphi 0, %s197
    %s215 = sphi 0, %s215
    %s217 = sphi 0, %s215
    %s218 = sphi 0, %s217
    %s232 = sphi 0, %s218
  $region4: #{encoder_forward.2} parent=0 // loop_header_branch
    %18 = sbr.rel (%p16) target = $region8
  $region5: #{encoder_forward.2} parent=0 // loop_body
    %s20 = ssub.s32 %s15, 1
    %s21 = ssub.s32 %s15, 2
    %s22 = sadd.s32 %s15, 1
    %s24 = sadd.s32 %s23, 1
    %p27 = scmp.eq.s32.totalorder %s15, 7
    %p28 = scmp.ne.s32.totalorder %s23, %s25
    %p29 = scmp.eq.s32.totalorder %s15, 0
    %p30 = por %p28, %p29
    %p31 = scmp.ne.s32.totalorder %s23, %s25
    %p32 = scmp.eq.s32.totalorder %s20, 7
    %p33 = por %p31, %p32
    %p34 = scmp.ne.s32.totalorder %s25, %s26
    %p35 = scmp.eq.s32.totalorder %s20, 0
    %p36 = por %p34, %p35
    %p37 = scmp.ne.s32.totalorder %s25, %s26
    %p38 = scmp.eq.s32.totalorder %s21, 7
    %p39 = por %p37, %p38
    %p41 = scmp.ne.s32.totalorder %s26, %s40
    %p42 = scmp.eq.s32.totalorder %s21, 0
    %p43 = por %p41, %p42
    %s44 = ssub.s32 %s15, %s22
    %p45 = scmp.eq.s32.totalorder %s44, 0
    %s47 = sadd.s32 %s46, 1
    %s48 = scalar_select %p45, %s46, %s47
    %p51 = pneg %p45
    %p52 = scmp.eq.s32.totalorder %s15, 7
    %p53 = por %p51, %p52
    %p54 = scmp.ne.s32.totalorder %s46, %s49
    %p55 = scmp.eq.s32.totalorder %s15, 0
    %p56 = por %p54, %p55
    %p57 = scmp.ne.s32.totalorder %s46, %s49
    %p58 = scmp.eq.s32.totalorder %s20, 7
    %p59 = por %p57, %p58
    %p60 = scmp.ne.s32.totalorder %s49, %s50
    %p61 = scmp.eq.s32.totalorder %s20, 0
    %p62 = por %p60, %p61
    %p63 = scmp.ne.s32.totalorder %s49, %s50
    %p64 = scmp.eq.s32.totalorder %s21, 7
    %p65 = por %p63, %p64
    %p67 = scmp.ne.s32.totalorder %s50, %s66
    %p68 = scmp.eq.s32.totalorder %s21, 0
    %p69 = por %p67, %p68
    %s70 = ssub.s32 7, %s15
    %s71 = ssub.s32 7, %s22
    %s72 = ssub.s32 %s70, %s71
    %p73 = scmp.eq.s32.totalorder %s72, 0
    %s75 = sadd.s32 %s74, 1
    %s76 = scalar_select %p73, %s74, %s75
    %p79 = pneg %p73
    %p80 = scmp.eq.s32.totalorder %s15, 7
    %p81 = por %p79, %p80
    %p82 = scmp.ne.s32.totalorder %s74, %s77
    %p83 = scmp.eq.s32.totalorder %s15, 0
    %p84 = por %p82, %p83
    %p85 = scmp.ne.s32.totalorder %s74, %s77
    %p86 = scmp.eq.s32.totalorder %s20, 7
    %p87 = por %p85, %p86
    %p88 = scmp.ne.s32.totalorder %s77, %s78
    %p89 = scmp.eq.s32.totalorder %s20, 0
    %p90 = por %p88, %p89
    %p91 = scmp.ne.s32.totalorder %s77, %s78
    %p92 = scmp.eq.s32.totalorder %s21, 7
    %p93 = por %p91, %p92
    %p95 = scmp.ne.s32.totalorder %s78, %s94
    %p96 = scmp.eq.s32.totalorder %s21, 0
    %p97 = por %p95, %p96
    %s99 = sadd.s32 %s98, 1
    %p102 = scmp.eq.s32.totalorder %s15, 7
    %p103 = scmp.ne.s32.totalorder %s98, %s100
    %p104 = scmp.eq.s32.totalorder %s15, 0
    %p105 = por %p103, %p104
    %p106 = scmp.ne.s32.totalorder %s98, %s100
    %p107 = scmp.eq.s32.totalorder %s20, 7
    %p108 = por %p106, %p107
    %p109 = scmp.ne.s32.totalorder %s100, %s101
    %p110 = scmp.eq.s32.totalorder %s20, 0
    %p111 = por %p109, %p110
    %p112 = scmp.ne.s32.totalorder %s100, %s101
    %p113 = scmp.eq.s32.totalorder %s21, 7
    %p114 = por %p112, %p113
    %p116 = scmp.ne.s32.totalorder %s101, %s115
    %p117 = scmp.eq.s32.totalorder %s21, 0
    %p118 = por %p116, %p117
    %s120 = sadd.s32 %s119, 1
    %p123 = scmp.eq.s32.totalorder %s15, 7
    %p124 = scmp.ne.s32.totalorder %s119, %s121
    %p125 = scmp.eq.s32.totalorder %s15, 0
    %p126 = por %p124, %p125
    %p127 = scmp.ne.s32.totalorder %s119, %s121
    %p128 = scmp.eq.s32.totalorder %s20, 7
    %p129 = por %p127, %p128
    %p130 = scmp.ne.s32.totalorder %s121, %s122
    %p131 = scmp.eq.s32.totalorder %s20, 0
    %p132 = por %p130, %p131
    %p133 = scmp.ne.s32.totalorder %s121, %s122
    %p134 = scmp.eq.s32.totalorder %s21, 7
    %p135 = por %p133, %p134
    %p137 = scmp.ne.s32.totalorder %s122, %s136
    %p138 = scmp.eq.s32.totalorder %s21, 0
    %p139 = por %p137, %p138
    %s140 = ssub.s32 %s15, %s22
    %p141 = scmp.eq.s32.totalorder %s140, 0
    %s143 = sadd.s32 %s142, 1
    %s144 = scalar_select %p141, %s142, %s143
    %p147 = pneg %p141
    %p148 = scmp.eq.s32.totalorder %s15, 7
    %p149 = por %p147, %p148
    %p150 = scmp.ne.s32.totalorder %s142, %s145
    %p151 = scmp.eq.s32.totalorder %s15, 0
    %p152 = por %p150, %p151
    %p153 = scmp.ne.s32.totalorder %s142, %s145
    %p154 = scmp.eq.s32.totalorder %s20, 7
    %p155 = por %p153, %p154
    %p156 = scmp.ne.s32.totalorder %s145, %s146
    %p157 = scmp.eq.s32.totalorder %s20, 0
    %p158 = por %p156, %p157
    %p159 = scmp.ne.s32.totalorder %s145, %s146
    %p160 = scmp.eq.s32.totalorder %s21, 7
    %p161 = por %p159, %p160
    %p163 = scmp.ne.s32.totalorder %s146, %s162
    %p164 = scmp.eq.s32.totalorder %s21, 0
    %p165 = por %p163, %p164
    %s166 = ssub.s32 7, %s15
    %s167 = ssub.s32 7, %s22
    %s168 = ssub.s32 %s166, %s167
    %p169 = scmp.eq.s32.totalorder %s168, 0
    %s171 = sadd.s32 %s170, 1
    %s172 = scalar_select %p169, %s170, %s171
    %p175 = pneg %p169
    %p176 = scmp.eq.s32.totalorder %s15, 7
    %p177 = por %p175, %p176
    %p178 = scmp.ne.s32.totalorder %s170, %s173
    %p179 = scmp.eq.s32.totalorder %s15, 0
    %p180 = por %p178, %p179
    %p181 = scmp.ne.s32.totalorder %s170, %s173
    %p182 = scmp.eq.s32.totalorder %s20, 7
    %p183 = por %p181, %p182
    %p184 = scmp.ne.s32.totalorder %s173, %s174
    %p185 = scmp.eq.s32.totalorder %s20, 0
    %p186 = por %p184, %p185
    %p187 = scmp.ne.s32.totalorder %s173, %s174
    %p188 = scmp.eq.s32.totalorder %s21, 7
    %p189 = por %p187, %p188
    %p191 = scmp.ne.s32.totalorder %s174, %s190
    %p192 = scmp.eq.s32.totalorder %s21, 0
    %p193 = por %p191, %p192
    %s195 = sadd.s32 %s194, 1
    %p198 = scmp.eq.s32.totalorder %s15, 7
    %p199 = scmp.ne.s32.totalorder %s194, %s196
    %p200 = scmp.eq.s32.totalorder %s15, 0
    %p201 = por %p199, %p200
    %p202 = scmp.ne.s32.totalorder %s194, %s196
    %p203 = scmp.eq.s32.totalorder %s20, 7
    %p204 = por %p202, %p203
    %p205 = scmp.ne.s32.totalorder %s196, %s197
    %p206 = scmp.eq.s32.totalorder %s20, 0
    %p207 = por %p205, %p206
    %p208 = scmp.ne.s32.totalorder %s196, %s197
    %p209 = scmp.eq.s32.totalorder %s21, 7
    %p210 = por %p208, %p209
    %p212 = scmp.ne.s32.totalorder %s197, %s211
    %p213 = scmp.eq.s32.totalorder %s21, 0
    %p214 = por %p212, %p213
    %s216 = sadd.s32 %s215, 1
    %p219 = scmp.eq.s32.totalorder %s15, 7
    %p220 = scmp.ne.s32.totalorder %s215, %s217
    %p221 = scmp.eq.s32.totalorder %s15, 0
    %p222 = por %p220, %p221
    %p223 = scmp.ne.s32.totalorder %s215, %s217
    %p224 = scmp.eq.s32.totalorder %s20, 7
    %p225 = por %p223, %p224
    %p226 = scmp.ne.s32.totalorder %s217, %s218
    %p227 = scmp.eq.s32.totalorder %s20, 0
    %p228 = por %p226, %p227
    %p229 = scmp.ne.s32.totalorder %s217, %s218
    %p230 = scmp.eq.s32.totalorder %s21, 7
    %p231 = por %p229, %p230
    %p233 = scmp.ne.s32.totalorder %s218, %s232
    %p234 = scmp.eq.s32.totalorder %s21, 0
    %p235 = por %p233, %p234
    %p236 = scmp.le.s32.totalorder 1, %s15
    %p237 = scmp.lt.s32.totalorder %s15, 9
    %p238 = pnand %p236, %p237
    %p239 = pneg %p238
    // Predicated region
    $region9: #{encoder_forward.2} parent=5 // pred_check
      _
    $region10: #{encoder_forward.2} parent=5 // pred_check_branch
      %241 = sbr.rel (%p238) target = $region12
    $region11: #{encoder_forward.2} parent=5 // pred_region
      %s242 = ssub.s32 %s15, 1
      // Predicated region
      $region13: #{encoder_forward.2} parent=11 // pred_check
        %p243 = pneg %p36
      $region14: #{encoder_forward.2} parent=11 // pred_check_branch
        %245 = sbr.rel (%p243) target = $region16
      $region15: #{encoder_forward.2} parent=11 // pred_region
        _
      $region16: #{encoder_forward.2} parent=11 // pred_fallthru
        _
      // Predicated region
      $region17: #{encoder_forward.2} parent=11 // pred_check
        %p246 = pneg %p111
      $region18: #{encoder_forward.2} parent=11 // pred_check_branch
        %248 = sbr.rel (%p246) target = $region20
      $region19: #{encoder_forward.2} parent=11 // pred_region
        _
      $region20: #{encoder_forward.2} parent=11 // pred_fallthru
        _
      // Predicated region
      $region21: #{encoder_forward.2} parent=11 // pred_check
        %p249 = pneg %p132
      $region22: #{encoder_forward.2} parent=11 // pred_check_branch
        %251 = sbr.rel (%p249) target = $region24
      $region23: #{encoder_forward.2} parent=11 // pred_region
        _
      $region24: #{encoder_forward.2} parent=11 // pred_fallthru
        _
    $region12: #{encoder_forward.2} parent=5 // pred_fallthru
      _
    %p252 = scmp.lt.s32.totalorder %s15, 8
    // Predicated region
    $region25: #{encoder_forward.2} parent=5 // pred_check
      %p253 = pneg %p252
    $region26: #{encoder_forward.2} parent=5 // pred_check_branch
      %255 = sbr.rel (%p253) target = $region28
    $region27: #{encoder_forward.2} parent=5 // pred_region
      // Predicated region
      $region29: #{encoder_forward.2} parent=27 // pred_check
        %p256 = pneg %p56
      $region30: #{encoder_forward.2} parent=27 // pred_check_branch
        %258 = sbr.rel (%p256) target = $region32
      $region31: #{encoder_forward.2} parent=27 // pred_region
        %p259 = scmp.lt.s32.totalorder %s15, 7
        %s260 = scalar_select %p259, %s15, 7
        %s261 = smul.addr %s260, 8
        %s262 = scalar_lea.vmem %s1, %s261
      $region32: #{encoder_forward.2} parent=27 // pred_fallthru
        _
      // Predicated region
      $region33: #{encoder_forward.2} parent=27 // pred_check
        %p263 = pneg %p84
      $region34: #{encoder_forward.2} parent=27 // pred_check_branch
        %265 = sbr.rel (%p263) target = $region36
      $region35: #{encoder_forward.2} parent=27 // pred_region
        %s266 = ssub.s32 7, %s15
        %p267 = scmp.lt.s32.totalorder %s266, 7
        %s268 = scalar_select %p267, %s266, 7
        %s269 = smul.addr %s268, 8
        %s270 = scalar_lea.vmem %s2, %s269
        %s271 = ssub.s32 7, %s15
      $region36: #{encoder_forward.2} parent=27 // pred_fallthru
        _
    $region28: #{encoder_forward.2} parent=5 // pred_fallthru
      _
    %p272 = scmp.le.s32.totalorder 1, %s15
    %p273 = scmp.lt.s32.totalorder %s15, 9
    %p274 = pnand %p272, %p273
    %p275 = pneg %p274
    // Predicated region
    $region37: #{encoder_forward.2} parent=5 // pred_check
      _
    $region38: #{encoder_forward.2} parent=5 // pred_check_branch
      %277 = sbr.rel (%p274) target = $region40
    $region39: #{encoder_forward.2} parent=5 // pred_region
      %s278 = ssub.s32 %s15, 1
      %p279 = pneg %p36
      %p280 = pneg %p33
      %p281 = scmp.lt.s32.totalorder %s20, 7
      %s282 = scalar_select %p281, %s20, 7
      %s283 = smul.addr %s282, 8
      %s284 = scalar_lea.vmem %s1, %s283
      %p285 = pneg %p62
      %p286 = pneg %p59
      %s287 = ssub.s32 7, %s20
      %p288 = scmp.lt.s32.totalorder %s287, 7
      %s289 = scalar_select %p288, %s287, 7
      %s290 = smul.addr %s289, 8
      %s291 = scalar_lea.vmem %s2, %s290
      %p292 = pneg %p90
      %p293 = pneg %p87
      %p294 = pneg %p111
      %p295 = pneg %p108
      %p296 = pneg %p132
      %p297 = pneg %p129
      %p298 = pneg %p158
      %p299 = pneg %p155
      %p300 = scmp.lt.s32.totalorder %s20, 7
      %s301 = scalar_select %p300, %s20, 7
      %s302 = smul.addr %s301, 8
      %s303 = scalar_lea.vmem %s5, %s302
      %p304 = pneg %p186
      %p305 = pneg %p183
      %s306 = ssub.s32 7, %s20
      %p307 = scmp.lt.s32.totalorder %s306, 7
      %s308 = scalar_select %p307, %s306, 7
      %s309 = smul.addr %s308, 8
      %s310 = scalar_lea.vmem %s6, %s309
      %p311 = pneg %p207
      %p312 = pneg %p204
      %p313 = pneg %p228
      %p314 = pneg %p225
      %p315 = scmp.lt.s32.totalorder %s20, 7
      %s316 = scalar_select %p315, %s20, 7
      %s317 = smul.addr %s316, 8
      %s318 = scalar_lea.vmem %s1, %s317
      %s319 = ssub.s32 7, %s20
      %p320 = scmp.lt.s32.totalorder %s319, 7
      %s321 = scalar_select %p320, %s319, 7
      %s322 = smul.addr %s321, 8
      %s323 = scalar_lea.vmem %s2, %s322
      %s324 = ssub.s32 7, %s20
      %p325 = scmp.lt.s32.totalorder %s20, 7
      %s326 = scalar_select %p325, %s20, 7
      %s327 = smul.addr %s326, 8
      %s328 = scalar_lea.vmem %s5, %s327
      %s329 = ssub.s32 7, %s20
      %p330 = scmp.lt.s32.totalorder %s329, 7
      %s331 = scalar_select %p330, %s329, 7
      %s332 = smul.addr %s331, 8
      %s333 = scalar_lea.vmem %s6, %s332
      %s334 = ssub.s32 7, %s20
      %p336 = scmp.eq.s32.totalorder %s20, 0
      // Predicated region
      $region41: #{encoder_forward.2} parent=39 // pred_check
        %p337 = pneg %p336
      $region42: #{encoder_forward.2} parent=39 // pred_check_branch
        %339 = sbr.rel (%p337) target = $region44
      $region43: #{encoder_forward.2} parent=39 // pred_region
        %vm340 = vcmask 261120
        %341 = vst.msk [vmem:[%s7] sm:$0xff] %vm340, 0.0
        %342 = vst.msk [vmem:[%s7 + $0x8] sm:$0xff] %vm340, 0.0
        %343 = vst.msk [vmem:[%s8] sm:$0xff] %vm340, 0.0
        %344 = vst.msk [vmem:[%s8 + $0x8] sm:$0xff] %vm340, 0.0
      $region44: #{encoder_forward.2} parent=39 // pred_fallthru
        _
      %v345 = vld [vmem:[%s0] sm:$0xff]
      %v346 = vld [vmem:[%s318] sm:$0xff]
      %v347 = vld [vmem:[%s3] sm:$0xf]
      %v348 = vld [vmem:[%s3 + $0x4] sm:$0xf]
      %v349 = vld [vmem:[%s3 + $0x8] sm:$0xf]
      %v350 = vld [vmem:[%s3 + $0xc] sm:$0xf]
      %v351 = vld [vmem:[%s7] sm:$0xff]
      %v352 = vld [vmem:[%s8] sm:$0xff]
      %v353 = vstv %s20
      %vm354 = vcmp.lt.s32.totalorder %v353, %v345
      %v355 = vpack.c.bf16 %v351, %v351
      %v360 = vunpack.c.l.b16 %v347
      %v361 = vunpack.c.l.b16 %v348
      %v362 = vunpack.c.l.b16 %v349
      %v363 = vunpack.c.l.b16 %v350
      %v364 = vpack.c.b16 %v361, %v360
      %v365 = vpack.c.b16 %v363, %v362
      %vm368 = vcmask 261120
      %v370 = vsel %vm368, %v355, 0
      %372 = vmatprep.subr.bf16.mxu0 0
      %373 = vmatpush1.bf16.msra.mxu0 %v364
      %374 = vmatprep.subr.bf16.mxu0 0
      %375 = vmatpush1.bf16.msra.mxu0 %v365
      %376 = vmatprep.subr.bf16.mxu0 0
      %377 = vmatpush1.bf16.msra.mxu0 0
      %378 = vmatprep.subr.bf16.mxu0 0
      %379 = vmatpush1.bf16.msra.mxu0 0
      %380 = vmatprep.subr.bf16.mxu0 0
      %381 = vmatpush1.bf16.msra.mxu0 0
      %382 = vmatprep.subr.bf16.mxu0 0
      %383 = vmatpush1.bf16.msra.mxu0 0
      %384 = vmatprep.subr.bf16.mxu0 0
      %385 = vmatpush1.bf16.msra.mxu0 0
      %386 = vmatprep.subr.bf16.mxu0 0
      %387 = vmatpush1.bf16.msra.mxu0 0
      %388 = vmatprep.subr.bf16.mxu0 0
      %389 = vmatpush1.bf16.msra.mxu0 0
      %390 = vmatprep.subr.bf16.mxu0 0
      %391 = vmatpush1.bf16.msra.mxu0 0
      %392 = vmatprep.subr.bf16.mxu0 0
      %393 = vmatpush1.bf16.msra.mxu0 0
      %394 = vmatprep.subr.bf16.mxu0 0
      %395 = vmatpush1.bf16.msra.mxu0 0
      %396 = vmatprep.subr.bf16.mxu0 0
      %397 = vmatpush1.bf16.msra.mxu0 0
      %398 = vmatprep.subr.bf16.mxu0 0
      %399 = vmatpush1.bf16.msra.mxu0 0
      %400 = vmatprep.subr.bf16.mxu0 0
      %401 = vmatpush1.bf16.msra.mxu0 0
      %402 = vmatprep.subr.bf16.mxu0 0
      %403 = vmatpush1.bf16.msra.mxu0 0
      %404 = vmatprep.mubr.bf16.mxu0 0
      %405 = vmatmul.mubr.bf16.gmra.mrb[0].mxu0 %v370
      %v406 = vpop.f32.mrb[0].mxu0
      %v407 = vadd.f32 0.0, %v406
      %v408 = vpop.f32.mrb[0].mxu0
      %v409 = vpop.f32.mrb[0].mxu0
      %v410 = vpop.f32.mrb[0].mxu0
      %411 = vdwg.mxu0
      %v412 = vadd.f32 %v346, %v407
      %v413 = vxor.u32 %v412, 2147483648
      %v414 = vmul.f32 %v413, 1.442695
      %v415 = vpow.pop %v414
      %v416 = vadd.f32 %v415, 1.0
      %v417 = vrcp.pop %v416
      %v418 = vmul.f32 1.0, %v417
      %v419 = vtanh.pop %v412
      %421 = vrot.lane.b32.xlu0 %v352, 32
      %v422 = vpop.permute.xlu0 %421
      %v424 = vmul.f32 %v418, %v422
      %426 = vrot.lane.b32.xlu0 %v419, 64
      %v427 = vpop.permute.xlu0 %426
      %v429 = vmul.f32 %v418, %v427
      %431 = vrot.lane.b32.xlu0 %v429, 32
      %v432 = vpop.permute.xlu0 %431
      %v434 = vadd.f32 %v424, %v432
      %v435 = vtanh.pop %v434
      %437 = vrot.lane.b32.xlu0 %v435, 64
      %v438 = vpop.permute.xlu0 %437
      %v440 = vmul.f32 %v418, %v438
      %v441 = vsel %vm354, 1, 0
      %442 = vset.pattern.permute.xlu0 0
      %443 = vperm.xlu0 %442, %v441
      %v444 = vpop.permute.xlu0 %443
      %vm445 = vcmp.eq.s32.totalorder %v444, 1
      %447 = vrot.lane.b32.xlu0 %v351, 96
      %v448 = vpop.permute.xlu0 %447
      %v450 = vsel %vm445, %v440, %v448
      %v451 = vsel %vm445, %v434, %v422
      %v452 = vsel %vm445, %v440, 0.0
      %454 = vrot.lane.b32.xlu0 %v450, 32
      %v455 = vpop.permute.xlu0 %454
      %457 = vst.msk [vmem:[%s7] sm:$0xff] %vm368, %v455
      %459 = vrot.lane.b32.xlu0 %v451, 96
      %v460 = vpop.permute.xlu0 %459
      %462 = vst.msk [vmem:[%s8] sm:$0xff] %vm368, %v460
      %464 = vrot.lane.b32.xlu0 %v452, 32
      %v465 = vpop.permute.xlu0 %464
      %467 = vst.msk [vmem:[%s328] sm:$0xff] %vm368, %v465
      %v468 = vld [vmem:[%s323] sm:$0xff]
      %v469 = vld [vmem:[%s4] sm:$0xf]
      %v470 = vld [vmem:[%s4 + $0x4] sm:$0xf]
      %v471 = vld [vmem:[%s4 + $0x8] sm:$0xf]
      %v472 = vld [vmem:[%s4 + $0xc] sm:$0xf]
      %s473 = scalar_lea.vmem %s7, 8
      %v474 = vld [vmem:[%s473] sm:$0xff]
      %s475 = scalar_lea.vmem %s8, 8
      %v476 = vld [vmem:[%s475] sm:$0xff]
      %s477 = ssub.s32 7, %s20
      %v478 = vstv %s477
      %vm479 = vcmp.lt.s32.totalorder %v478, %v345
      %v480 = vpack.c.bf16 %v474, %v474
      %v485 = vunpack.c.l.b16 %v469
      %v486 = vunpack.c.l.b16 %v470
      %v487 = vunpack.c.l.b16 %v471
      %v488 = vunpack.c.l.b16 %v472
      %v489 = vpack.c.b16 %v486, %v485
      %v490 = vpack.c.b16 %v488, %v487
      %v494 = vsel %vm368, %v480, 0
      %496 = vmatprep.subr.bf16.mxu0 0
      %497 = vmatpush1.bf16.msra.mxu0 %v489
      %498 = vmatprep.subr.bf16.mxu0 0
      %499 = vmatpush1.bf16.msra.mxu0 %v490
      %500 = vmatprep.subr.bf16.mxu0 0
      %501 = vmatpush1.bf16.msra.mxu0 0
      %502 = vmatprep.subr.bf16.mxu0 0
      %503 = vmatpush1.bf16.msra.mxu0 0
      %504 = vmatprep.subr.bf16.mxu0 0
      %505 = vmatpush1.bf16.msra.mxu0 0
      %506 = vmatprep.subr.bf16.mxu0 0
      %507 = vmatpush1.bf16.msra.mxu0 0
      %508 = vmatprep.subr.bf16.mxu0 0
      %509 = vmatpush1.bf16.msra.mxu0 0
      %510 = vmatprep.subr.bf16.mxu0 0
      %511 = vmatpush1.bf16.msra.mxu0 0
      %512 = vmatprep.subr.bf16.mxu0 0
      %513 = vmatpush1.bf16.msra.mxu0 0
      %514 = vmatprep.subr.bf16.mxu0 0
      %515 = vmatpush1.bf16.msra.mxu0 0
      %516 = vmatprep.subr.bf16.mxu0 0
      %517 = vmatpush1.bf16.msra.mxu0 0
      %518 = vmatprep.subr.bf16.mxu0 0
      %519 = vmatpush1.bf16.msra.mxu0 0
      %520 = vmatprep.subr.bf16.mxu0 0
      %521 = vmatpush1.bf16.msra.mxu0 0
      %522 = vmatprep.subr.bf16.mxu0 0
      %523 = vmatpush1.bf16.msra.mxu0 0
      %524 = vmatprep.subr.bf16.mxu0 0
      %525 = vmatpush1.bf16.msra.mxu0 0
      %526 = vmatprep.subr.bf16.mxu0 0
      %527 = vmatpush1.bf16.msra.mxu0 0
      %528 = vmatprep.mubr.bf16.mxu0 0
      %529 = vmatmul.mubr.bf16.gmra.mrb[0].mxu0 %v494
      %v530 = vpop.f32.mrb[0].mxu0
      %v531 = vadd.f32 0.0, %v530
      %v532 = vpop.f32.mrb[0].mxu0
      %v533 = vpop.f32.mrb[0].mxu0
      %v534 = vpop.f32.mrb[0].mxu0
      %535 = vdwg.mxu0
      %v536 = vadd.f32 %v468, %v531
      %v537 = vxor.u32 %v536, 2147483648
      %v538 = vmul.f32 %v537, 1.442695
      %v539 = vpow.pop %v538
      %v540 = vadd.f32 %v539, 1.0
      %v541 = vrcp.pop %v540
      %v542 = vmul.f32 1.0, %v541
      %v543 = vtanh.pop %v536
      %545 = vrot.lane.b32.xlu0 %v476, 32
      %v546 = vpop.permute.xlu0 %545
      %v548 = vmul.f32 %v542, %v546
      %550 = vrot.lane.b32.xlu0 %v543, 64
      %v551 = vpop.permute.xlu0 %550
      %v553 = vmul.f32 %v542, %v551
      %555 = vrot.lane.b32.xlu0 %v553, 32
      %v556 = vpop.permute.xlu0 %555
      %v558 = vadd.f32 %v548, %v556
      %v559 = vtanh.pop %v558
      %561 = vrot.lane.b32.xlu0 %v559, 64
      %v562 = vpop.permute.xlu0 %561
      %v564 = vmul.f32 %v542, %v562
      %v565 = vsel %vm479, 1, 0
      %566 = vset.pattern.permute.xlu0 0
      %567 = vperm.xlu0 %566, %v565
      %v568 = vpop.permute.xlu0 %567
      %vm569 = vcmp.eq.s32.totalorder %v568, 1
      %571 = vrot.lane.b32.xlu0 %v474, 96
      %v572 = vpop.permute.xlu0 %571
      %v574 = vsel %vm569, %v564, %v572
      %v575 = vsel %vm569, %v558, %v546
      %v576 = vsel %vm569, %v564, 0.0
      %578 = vrot.lane.b32.xlu0 %v574, 32
      %v579 = vpop.permute.xlu0 %578
      %581 = vst.msk [vmem:[%s473] sm:$0xff] %vm368, %v579
      %583 = vrot.lane.b32.xlu0 %v575, 96
      %v584 = vpop.permute.xlu0 %583
      %586 = vst.msk [vmem:[%s475] sm:$0xff] %vm368, %v584
      %588 = vrot.lane.b32.xlu0 %v576, 32
      %v589 = vpop.permute.xlu0 %588
      %591 = vst.msk [vmem:[%s333] sm:$0xff] %vm368, %v589
      %p592 = scmp.lt.s32.totalorder %s20, 7
      %s593 = scalar_select %p592, %s20, 7
      %s594 = smul.addr %s593, 8
      %s595 = scalar_lea.vmem %s5, %s594
      %s596 = ssub.s32 7, %s20
      %p597 = scmp.lt.s32.totalorder %s596, 7
      %s598 = scalar_select %p597, %s596, 7
      %s599 = smul.addr %s598, 8
      %s600 = scalar_lea.vmem %s6, %s599
      // Predicated region
      $region45: #{encoder_forward.2} parent=39 // pred_check
        %p601 = pneg %p155
      $region46: #{encoder_forward.2} parent=39 // pred_check_branch
        %603 = sbr.rel (%p601) target = $region48
      $region47: #{encoder_forward.2} parent=39 // pred_region
        _
      $region48: #{encoder_forward.2} parent=39 // pred_fallthru
        _
      // Predicated region
      $region49: #{encoder_forward.2} parent=39 // pred_check
        %p604 = pneg %p183
      $region50: #{encoder_forward.2} parent=39 // pred_check_branch
        %606 = sbr.rel (%p604) target = $region52
      $region51: #{encoder_forward.2} parent=39 // pred_region
        %s607 = ssub.s32 7, %s20
      $region52: #{encoder_forward.2} parent=39 // pred_fallthru
        _
      // Predicated region
      $region53: #{encoder_forward.2} parent=39 // pred_check
        %p608 = pneg %p204
      $region54: #{encoder_forward.2} parent=39 // pred_check_branch
        %610 = sbr.rel (%p608) target = $region56
      $region55: #{encoder_forward.2} parent=39 // pred_region
        _
      $region56: #{encoder_forward.2} parent=39 // pred_fallthru
        _
      // Predicated region
      $region57: #{encoder_forward.2} parent=39 // pred_check
        %p611 = pneg %p225
      $region58: #{encoder_forward.2} parent=39 // pred_check_branch
        %613 = sbr.rel (%p611) target = $region60
      $region59: #{encoder_forward.2} parent=39 // pred_region
        _
      $region60: #{encoder_forward.2} parent=39 // pred_fallthru
        _
      // Predicated region
      $region61: #{encoder_forward.2} parent=39 // pred_check
        %p614 = pneg %p204
      $region62: #{encoder_forward.2} parent=39 // pred_check_branch
        %616 = sbr.rel (%p614) target = $region64
      $region63: #{encoder_forward.2} parent=39 // pred_region
        _
      $region64: #{encoder_forward.2} parent=39 // pred_fallthru
        _
      // Predicated region
      $region65: #{encoder_forward.2} parent=39 // pred_check
        %p617 = pneg %p225
      $region66: #{encoder_forward.2} parent=39 // pred_check_branch
        %619 = sbr.rel (%p617) target = $region68
      $region67: #{encoder_forward.2} parent=39 // pred_region
        _
      $region68: #{encoder_forward.2} parent=39 // pred_fallthru
        _
    $region40: #{encoder_forward.2} parent=5 // pred_fallthru
      _
    %p620 = scmp.le.s32.totalorder 2, %s15
    // Predicated region
    $region69: #{encoder_forward.2} parent=5 // pred_check
      %p621 = pneg %p620
    $region70: #{encoder_forward.2} parent=5 // pred_check_branch
      %623 = sbr.rel (%p621) target = $region72
    $region71: #{encoder_forward.2} parent=5 // pred_region
      %s624 = ssub.s32 %s15, 2
      // Predicated region
      $region73: #{encoder_forward.2} parent=71 // pred_check
        %p625 = pneg %p161
      $region74: #{encoder_forward.2} parent=71 // pred_check_branch
        %627 = sbr.rel (%p625) target = $region76
      $region75: #{encoder_forward.2} parent=71 // pred_region
        %p628 = scmp.lt.s32.totalorder %s21, 7
        %s629 = scalar_select %p628, %s21, 7
        %s630 = smul.addr %s629, 8
        %s631 = scalar_lea.vmem %s5, %s630
      $region76: #{encoder_forward.2} parent=71 // pred_fallthru
        _
      // Predicated region
      $region77: #{encoder_forward.2} parent=71 // pred_check
        %p632 = pneg %p189
      $region78: #{encoder_forward.2} parent=71 // pred_check_branch
        %634 = sbr.rel (%p632) target = $region80
      $region79: #{encoder_forward.2} parent=71 // pred_region
        %s635 = ssub.s32 7, %s21
        %p636 = scmp.lt.s32.totalorder %s635, 7
        %s637 = scalar_select %p636, %s635, 7
        %s638 = smul.addr %s637, 8
        %s639 = scalar_lea.vmem %s6, %s638
      $region80: #{encoder_forward.2} parent=71 // pred_fallthru
        _
    $region72: #{encoder_forward.2} parent=5 // pred_fallthru
      _
  $region6: #{encoder_forward.2} parent=0 // loop_footer
    %s19 = sadd.s32 1, %s15
  $region7: #{encoder_forward.2} parent=0 // loop_footer_branch
    %14 = sbr.rel target = $region3
  $region8: #{encoder_forward.2} parent=0 // loop_exit
    _

</llo_original>
